<compile_context>
chip_gen: v5e
topology: v5e:2x2
jax: 0.10.0
libtpu: 0.0.40
codegen_flags: <defaults>
</compile_context>

<pallas_src>
import numpy as np
import jax
import jax.numpy as jnp
from jax.experimental import pallas as pl
from jax.experimental.pallas import tpu as pltpu

_LANES = 128
_ROW_ALIGN = 16            # row tiles a multiple of 16 -> valid sublane tiling for bf16 too
_Z_CLAMP = 13.815509557963774   # logit(0.999999) == -logit(1e-6)


def _round_up(x, m):
    return ((x + m - 1) // m) * m


def _default_num_parallel():
    """2-way 'parallel' leading grid axis only on chips with 2 TensorCores (v7x)."""
    try:
        kind = jax.devices()[0].device_kind.lower()
    except Exception:
        return 1
    return 2 if ("v7" in kind or "tpu7" in kind) else 1


def _table_lookup(tab_ref, idx):
    """out[r, l] = table[idx[r, l]] via lane-wise gather, 128 table entries per chunk."""
    rows = idx.shape[0]
    t_pad = tab_ref.shape[1]
    n_chunks = t_pad // _LANES
    if n_chunks == 1:
        src = jnp.broadcast_to(tab_ref[...], (rows, _LANES))
        return jnp.take_along_axis(src, idx, axis=-1)
    out = jnp.zeros((rows, _LANES), jnp.float32)
    for c in range(n_chunks):                                  # static, usually 1
        src = jnp.broadcast_to(tab_ref[:, c * _LANES:(c + 1) * _LANES], (rows, _LANES))
        local = idx - c * _LANES
        hit = (local >= 0) & (local < _LANES)
        gathered = jnp.take_along_axis(src, jnp.clip(local, 0, _LANES - 1), axis=-1)
        out = jnp.where(hit, gathered, out)
    return out


def _loglik_tile(w, vb, vp, e1, e2):
    """Per-element log-likelihood contribution (f32); zero-padded entries give exactly 0."""
    z = vp + w * (vb - vp)                     # = w*vb + (1-w)*vp, FMA-shaped
    z = jnp.clip(z, -_Z_CLAMP, _Z_CLAMP)       # == clamp(prob, 1e-6, 0.999999)
    softplus = jnp.log(1.0 + jnp.exp(z))       # 2 EUP ops / element
    return e1 * z - (e1 + e2) * softplus       # == e1*log(p) + e2*log(1-p)


def _vs_fused_kernel(w_ref, v1_ref, v2_ref, idx_ref, e1_ref, e2_ref, out_ref):
    # w_ref  : (1, 1)       SMEM  mixing weight
    # v1_ref : (1, T1_pad)  VMEM  batter table   (resident: constant block index)
    # v2_ref : (1, T2_pad)  VMEM  pitcher table  (resident)
    # idx_ref: (tr, 128)    VMEM  int32, batter | (pitcher << 16)
    # e1_ref : (tr, 128)    VMEM  event1 counts (bf16 or f32)
    # e2_ref : (tr, 128)    VMEM  event2 counts
    # out_ref: (8, 128)     VMEM  f32 per-(sublane, lane) partial log-likelihood
    k = pl.program_id(1)

    @pl.when(k == 0)
    def _init():
        out_ref[...] = jnp.zeros_like(out_ref)

    w = w_ref[0, 0]
    packed = idx_ref[...]
    b_idx = packed & 0xFFFF
    p_idx = packed >> 16          # pitcher table < 32768 => sign bit never set
    vb = _table_lookup(v1_ref, b_idx)
    vp = _table_lookup(v2_ref, p_idx)
    e1 = e1_ref[...].astype(jnp.float32)
    e2 = e2_ref[...].astype(jnp.float32)
    contrib = _loglik_tile(w, vb, vp, e1, e2)          # (tr, 128) f32
    tr = contrib.shape[0]
    # Fold the tile onto the (8, 128) resident accumulator (pure VALU adds;
    # no cross-lane reduce inside the hot loop).
    out_ref[...] += contrib.reshape(tr // 8, 8, _LANES).sum(axis=0)


def _vs_pregathered_kernel(w_ref, vb_ref, vp_ref, e1_ref, e2_ref, out_ref):
    # Fallback kernel: pre-gathered f32 slabs, (tr, 128) output block is the accumulator.
    k = pl.program_id(1)

    @pl.when(k == 0)
    def _init():
        out_ref[...] = jnp.zeros_like(out_ref)

    w = w_ref[0, 0]
    out_ref[...] += _loglik_tile(w, vb_ref[...], vp_ref[...],
                                 e1_ref[...].astype(jnp.float32),
                                 e2_ref[...].astype(jnp.float32))


def _pregathered_loglik(w, v1, v2, batter_idx, pitcher_idx, event1, event2,
                        tr, k_steps, num_parallel, n):
    """Known-good fallback path (v1-style): gather in the wrapper, f32 slabs."""
    total_rows = num_parallel * k_steps * tr
    n_pad = total_rows * _LANES

    def slab(x):
        return jnp.pad(x.astype(jnp.float32), (0, n_pad - n)).reshape(total_rows, _LANES)

    vb = slab(v1.astype(jnp.float32)[batter_idx])
    vp = slab(v2.astype(jnp.float32)[pitcher_idx])
    e1, e2 = slab(event1), slab(event2)
    in_map = lambda p, k: (p * k_steps + k, 0)
    out_map = lambda p, k: (p, 0)
    partial = pl.pallas_call(
        _vs_pregathered_kernel,
        out_shape=jax.ShapeDtypeStruct((num_parallel * tr, _LANES), jnp.float32),
        grid_spec=pltpu.PrefetchScalarGridSpec(
            num_scalar_prefetch=0,
            grid=(num_parallel, k_steps),
            in_specs=[pl.BlockSpec(memory_space=pltpu.MemorySpace.SMEM)]
                     + [pl.BlockSpec((tr, _LANES), in_map)] * 4,
            out_specs=pl.BlockSpec((tr, _LANES), out_map),
        ),
        compiler_params=pltpu.CompilerParams(
            dimension_semantics=("parallel", "arbitrary")),
    )(w, vb, vp, e1, e2)
    return jnp.sum(partial)


def vs_model_loglikelihood(weight, v1, v2, batter_idx, pitcher_idx, event1, event2,
                           *, tile_rows=2048, num_parallel=None,
                           event_dtype=jnp.bfloat16):
    """Pallas implementation of VSModel.forward(). Returns a scalar float32.

    batter_idx / pitcher_idx are the integer positions of versus['batter'] /
    versus['pitcher'] in the parameter tables (the string .index() lookup of
    the torch module is host preprocessing, not kernel work).
    event_dtype=bf16 is exact for integer counts < 256; pass jnp.float32 to
    keep full precision on the streamed event counts.
    """
    n = int(batter_idx.shape[0])
    if n == 0:
        return jnp.float32(0.0)
    n_b, n_p = int(v1.shape[0]), int(v2.shape[0])
    assert n_b < (1 << 16) and n_p < (1 << 15), "index packing assumes small player tables"
    if num_parallel is None:
        num_parallel = _default_num_parallel()

    # Lane-dense tiling: 128 matchups/row, tr rows per tile, k_steps tiles per shard.
    rows = -(-n // _LANES)
    rows_per_p = -(-rows // num_parallel)
    tr = max(_ROW_ALIGN, _round_up(min(int(tile_rows), rows_per_p), _ROW_ALIGN))
    k_steps = max(1, -(-rows_per_p // tr))
    total_rows = num_parallel * k_steps * tr
    n_pad = total_rows * _LANES

    def slab(x, dtype):
        # Zero padding contributes exactly 0 to the log-likelihood (e1 = e2 = 0).
        return jnp.pad(x.astype(dtype), (0, n_pad - n)).reshape(total_rows, _LANES)

    # One packed int32 index stream + two narrow event streams => ~8 B/matchup
    # of HBM traffic inside the kernel.
    packed_idx = slab(batter_idx.astype(jnp.int32)
                      | (pitcher_idx.astype(jnp.int32) << 16), jnp.int32)
    e1 = slab(event1, event_dtype)
    e2 = slab(event2, event_dtype)

    # Tiny parameter tables, padded to lane multiples, kept resident in VMEM.
    t1_pad = _round_up(max(n_b, 1), _LANES)
    t2_pad = _round_up(max(n_p, 1), _LANES)
    v1_tab = jnp.pad(v1.astype(jnp.float32), (0, t1_pad - n_b)).reshape(1, t1_pad)
    v2_tab = jnp.pad(v2.astype(jnp.float32), (0, t2_pad - n_p)).reshape(1, t2_pad)
    w = jnp.reshape(jnp.asarray(weight, jnp.float32), (1, 1))

    in_map = lambda p, k: (p * k_steps + k, 0)
    tab_map = lambda p, k: (0, 0)
    out_map = lambda p, k: (p, 0)

    try:
        partial = pl.pallas_call(
            _vs_fused_kernel,
            out_shape=jax.ShapeDtypeStruct((num_parallel * 8, _LANES), jnp.float32),
            grid_spec=pltpu.PrefetchScalarGridSpec(
                num_scalar_prefetch=0,
                grid=(num_parallel, k_steps),
                in_specs=[
                    pl.BlockSpec(memory_space=pltpu.MemorySpace.SMEM),  # weight scalar
                    pl.BlockSpec((1, t1_pad), tab_map),                 # v1 table (resident)
                    pl.BlockSpec((1, t2_pad), tab_map),                 # v2 table (resident)
                    pl.BlockSpec((tr, _LANES), in_map),                 # packed indices
                    pl.BlockSpec((tr, _LANES), in_map),                 # event1
                    pl.BlockSpec((tr, _LANES), in_map),                 # event2
                ],
                out_specs=pl.BlockSpec((8, _LANES), out_map),
            ),
            compiler_params=pltpu.CompilerParams(
                dimension_semantics=("parallel", "arbitrary")),
        )(w, v1_tab, v2_tab, packed_idx, e1, e2)
    except Exception:
        # If the in-kernel lane gather does not lower on this backend, fall back
        # to the pre-gathered variant so the op always runs.
        return _pregathered_loglik(w, v1, v2, batter_idx, pitcher_idx, event1, event2,
                                   tr, k_steps, num_parallel, n)

    # Single tiny cross-lane reduction of the (num_parallel*8, 128) partials.
    return jnp.sum(partial)


def _reference_loglikelihood(weight, v1, v2, batter_idx, pitcher_idx, event1, event2):
    """Pure-NumPy port of the PyTorch forward loop (for correctness checking)."""
    w = float(np.asarray(weight).reshape(-1)[0])
    ll = 0.0
    for i in range(len(batter_idx)):
        z = w * float(v1[batter_idx[i]]) + (1.0 - w) * float(v2[pitcher_idx[i]])
        temp = np.exp(z)
        prob = np.clip(temp / (1.0 + temp), 1e-6, 0.999999)
        ll += float(event1[i]) * np.log(prob) + float(event2[i]) * np.log(1.0 - prob)
    return ll


if __name__ == "__main__":
    key = jax.random.PRNGKey(0)
    k1, k2, k3, k4, k5, k6 = jax.random.split(key, 6)

    n_batters, n_pitchers, n_versus = 5, 7, 300

    # Parameters as in VSModel.__init__: v = average - 1, weight = 0.5.
    batter_avg = jax.random.uniform(k1, (n_batters,), minval=0.2, maxval=0.35)
    pitcher_avg = jax.random.uniform(k2, (n_pitchers,), minval=0.2, maxval=0.35)
    v1 = (batter_avg - 1.0).astype(jnp.float32)
    v2 = (pitcher_avg - 1.0).astype(jnp.float32)
    weight = jnp.array([0.5], dtype=jnp.float32)

    # "versus" table, with the string name->index lookup already resolved to ints.
    batter_idx = jax.random.randint(k3, (n_versus,), 0, n_batters, dtype=jnp.int32)
    pitcher_idx = jax.random.randint(k4, (n_versus,), 0, n_pitchers, dtype=jnp.int32)
    event1 = jax.random.randint(k5, (n_versus,), 0, 10).astype(jnp.float32)
    event2 = jax.random.randint(k6, (n_versus,), 0, 10).astype(jnp.float32)

    ll = vs_model_loglikelihood(weight, v1, v2, batter_idx, pitcher_idx, event1, event2)
    ll = float(jax.block_until_ready(ll))

    ref = _reference_loglikelihood(
        np.asarray(weight), np.asarray(v1), np.asarray(v2),
        np.asarray(batter_idx), np.asarray(pitcher_idx),
        np.asarray(event1), np.asarray(event2))

    assert np.allclose(ll, ref, rtol=1e-4, atol=1e-3), (ll, ref)
    print("KERNEL_OK")
</pallas_src>

<mosaic_0001>
module attributes {stable_mosaic.version = 11 : i64} {
  func.func @_vs_fused_kernel(%arg0: i32, %arg1: i32, %arg2: memref<1x1xf32, #tpu.memory_space<smem>>, %arg3: memref<1x128xf32, #tpu.memory_space<vmem>>, %arg4: memref<1x128xf32, #tpu.memory_space<vmem>>, %arg5: memref<16x128xi32, #tpu.memory_space<vmem>>, %arg6: memref<16x128xbf16, #tpu.memory_space<vmem>>, %arg7: memref<16x128xbf16, #tpu.memory_space<vmem>>, %arg8: memref<8x128xf32, #tpu.memory_space<vmem>>) attributes {dimension_semantics = [#tpu.dimension_semantics<parallel>, #tpu.dimension_semantics<arbitrary>], iteration_bounds = array<i64: 1, 1>, scalar_prefetch = 0 : i64, scratch_operands = 0 : i64, tpu.core_type = #tpu.core_type<tc>, window_params = [{transform_indices = @transform_0, window_bounds = array<i64: 1, 1>}, {pipeline_mode = #tpu.pipeline_mode<synchronous>, transform_indices = @transform_1, window_bounds = array<i64: 1, 128>}, {pipeline_mode = #tpu.pipeline_mode<synchronous>, transform_indices = @transform_2, window_bounds = array<i64: 1, 128>}, {transform_indices = @transform_3, window_bounds = array<i64: 16, 128>}, {transform_indices = @transform_4, window_bounds = array<i64: 16, 128>}, {transform_indices = @transform_5, window_bounds = array<i64: 16, 128>}, {transform_indices = @transform_6, window_bounds = array<i64: 8, 128>}]} {
    %c0_i32 = arith.constant 0 : i32
    %0 = arith.cmpi eq, %arg1, %c0_i32 : i32
    %1 = arith.extui %0 : i1 to i32
    %c0_i32_0 = arith.constant 0 : i32
    %2 = arith.cmpi ne, %1, %c0_i32_0 : i32
    scf.if %2 {
      %cst_22 = arith.constant 0.000000e+00 : f32
      %56 = vector.broadcast %cst_22 : f32 to vector<8x128xf32>
      %c0_23 = arith.constant 0 : index
      %c0_24 = arith.constant 0 : index
      %57 = vector.load %arg8[%c0_23, %c0_24] : memref<8x128xf32, #tpu.memory_space<vmem>>, vector<8x128xf32>
      tpu.vector_store %arg8[%c0_23, %c0_24], %56 {strides = array<i32>} : memref<8x128xf32, #tpu.memory_space<vmem>>, vector<8x128xf32>,
    } else {
    }
    %c0 = arith.constant 0 : index
    %c0_1 = arith.constant 0 : index
    %3 = memref.load %arg2[%c0, %c0_1] : memref<1x1xf32, #tpu.memory_space<smem>>
    %c0_2 = arith.constant 0 : index
    %c0_3 = arith.constant 0 : index
    %4 = vector.load %arg5[%c0_2, %c0_3] : memref<16x128xi32, #tpu.memory_space<vmem>>, vector<16x128xi32>
    %c65535_i32 = arith.constant 65535 : i32
    %5 = vector.broadcast %c65535_i32 : i32 to vector<16x128xi32>
    %6 = arith.andi %4, %5 : vector<16x128xi32>
    %c16_i32 = arith.constant 16 : i32
    %7 = vector.broadcast %c16_i32 : i32 to vector<16x128xi32>
    %8 = arith.shrsi %4, %7 : vector<16x128xi32>
    %c0_4 = arith.constant 0 : index
    %c0_5 = arith.constant 0 : index
    %9 = vector.load %arg3[%c0_4, %c0_5] : memref<1x128xf32, #tpu.memory_space<vmem>>, vector<1x128xf32>
    %10 = vector.shape_cast %9 : vector<1x128xf32> to vector<1x128xf32>
    %11 = vector.broadcast %10 : vector<1x128xf32> to vector<16x128xf32>
    %c0_i32_6 = arith.constant 0 : i32
    %12 = vector.broadcast %c0_i32_6 : i32 to vector<16x128xi32>
    %13 = arith.cmpi slt, %6, %12 : vector<16x128xi32>
    %c128_i32 = arith.constant 128 : i32
    %14 = vector.broadcast %c128_i32 : i32 to vector<16x128xi32>
    %15 = arith.addi %6, %14 : vector<16x128xi32>
    %16 = arith.select %13, %15, %6 : vector<16x128xi1>, vector<16x128xi32>
    %17 = vector.shape_cast %16 : vector<16x128xi32> to vector<16x128x1xi32>
    %18 = vector.shape_cast %17 : vector<16x128x1xi32> to vector<16x128xi32>
    %19 = tpu.dynamic_gather %11[%18] in [1] : vector<16x128xf32>, vector<16x128xi32> -> vector<16x128xf32>
    %c0_7 = arith.constant 0 : index
    %c0_8 = arith.constant 0 : index
    %20 = vector.load %arg4[%c0_7, %c0_8] : memref<1x128xf32, #tpu.memory_space<vmem>>, vector<1x128xf32>
    %21 = vector.shape_cast %20 : vector<1x128xf32> to vector<1x128xf32>
    %22 = vector.broadcast %21 : vector<1x128xf32> to vector<16x128xf32>
    %c0_i32_9 = arith.constant 0 : i32
    %23 = vector.broadcast %c0_i32_9 : i32 to vector<16x128xi32>
    %24 = arith.cmpi slt, %8, %23 : vector<16x128xi32>
    %c128_i32_10 = arith.constant 128 : i32
    %25 = vector.broadcast %c128_i32_10 : i32 to vector<16x128xi32>
    %26 = arith.addi %8, %25 : vector<16x128xi32>
    %27 = arith.select %24, %26, %8 : vector<16x128xi1>, vector<16x128xi32>
    %28 = vector.shape_cast %27 : vector<16x128xi32> to vector<16x128x1xi32>
    %29 = vector.shape_cast %28 : vector<16x128x1xi32> to vector<16x128xi32>
    %30 = tpu.dynamic_gather %22[%29] in [1] : vector<16x128xf32>, vector<16x128xi32> -> vector<16x128xf32>
    %c0_11 = arith.constant 0 : index
    %c0_12 = arith.constant 0 : index
    %31 = vector.load %arg6[%c0_11, %c0_12] : memref<16x128xbf16, #tpu.memory_space<vmem>>, vector<16x128xbf16>
    %32 = arith.extf %31 : vector<16x128xbf16> to vector<16x128xf32>
    %c0_13 = arith.constant 0 : index
    %c0_14 = arith.constant 0 : index
    %33 = vector.load %arg7[%c0_13, %c0_14] : memref<16x128xbf16, #tpu.memory_space<vmem>>, vector<16x128xbf16>
    %34 = arith.extf %33 : vector<16x128xbf16> to vector<16x128xf32>
    %35 = arith.subf %19, %30 : vector<16x128xf32>
    %36 = vector.broadcast %3 : f32 to vector<16x128xf32>
    %37 = arith.mulf %36, %35 : vector<16x128xf32>
    %38 = arith.addf %30, %37 : vector<16x128xf32>
    %cst = arith.constant -13.8155098 : f32
    %cst_15 = arith.constant 13.8155098 : f32
    %39 = vector.broadcast %cst : f32 to vector<16x128xf32>
    %40 = arith.maximumf %39, %38 : vector<16x128xf32>
    %41 = vector.broadcast %cst_15 : f32 to vector<16x128xf32>
    %42 = arith.minimumf %41, %40 : vector<16x128xf32>
    %43 = math.exp %42 : vector<16x128xf32>
    %cst_16 = arith.constant 1.000000e+00 : f32
    %44 = vector.broadcast %cst_16 : f32 to vector<16x128xf32>
    %45 = arith.addf %44, %43 : vector<16x128xf32>
    %46 = math.log %45 : vector<16x128xf32>
    %47 = arith.mulf %32, %42 : vector<16x128xf32>
    %48 = arith.addf %32, %34 : vector<16x128xf32>
    %49 = arith.mulf %48, %46 : vector<16x128xf32>
    %50 = arith.subf %47, %49 : vector<16x128xf32>
    %c0_17 = arith.constant 0 : index
    %c0_18 = arith.constant 0 : index
    %51 = vector.load %arg8[%c0_17, %c0_18] : memref<8x128xf32, #tpu.memory_space<vmem>>, vector<8x128xf32>
    %52 = vector.shape_cast %50 : vector<16x128xf32> to vector<2x8x128xf32>
    %cst_19 = arith.constant dense<0.000000e+00> : vector<8x128xf32>
    %53 = vector.multi_reduction <add>, %52, %cst_19 [0] : vector<2x8x128xf32> to vector<8x128xf32>
    %54 = arith.addf %51, %53 : vector<8x128xf32>
    %c0_20 = arith.constant 0 : index
    %c0_21 = arith.constant 0 : index
    %55 = vector.load %arg8[%c0_20, %c0_21] : memref<8x128xf32, #tpu.memory_space<vmem>>, vector<8x128xf32>
    tpu.vector_store %arg8[%c0_20, %c0_21], %54 {strides = array<i32>} : memref<8x128xf32, #tpu.memory_space<vmem>>, vector<8x128xf32>,
    return
  }
  func.func @transform_0(%arg0: i32, %arg1: i32) -> (i32, i32) {
    %c0_i32 = arith.constant 0 : i32
    %c0_i32_0 = arith.constant 0 : i32
    %c0_i32_1 = arith.constant 0 : i32
    return %c0_i32, %c0_i32_0 : i32, i32
  }
  func.func @transform_1(%arg0: i32, %arg1: i32) -> (i32, i32) {
    %c0_i32 = arith.constant 0 : i32
    %c0_i32_0 = arith.constant 0 : i32
    %c0_i32_1 = arith.constant 0 : i32
    return %c0_i32, %c0_i32_0 : i32, i32
  }
  func.func @transform_2(%arg0: i32, %arg1: i32) -> (i32, i32) {
    %c0_i32 = arith.constant 0 : i32
    %c0_i32_0 = arith.constant 0 : i32
    %c0_i32_1 = arith.constant 0 : i32
    return %c0_i32, %c0_i32_0 : i32, i32
  }
  func.func @transform_3(%arg0: i32, %arg1: i32) -> (i32, i32) {
    %c1_i32 = arith.constant 1 : i32
    %0 = arith.muli %arg0, %c1_i32 : i32
    %1 = arith.addi %0, %arg1 : i32
    %c0_i32 = arith.constant 0 : i32
    %c0_i32_0 = arith.constant 0 : i32
    return %1, %c0_i32 : i32, i32
  }
  func.func @transform_4(%arg0: i32, %arg1: i32) -> (i32, i32) {
    %c1_i32 = arith.constant 1 : i32
    %0 = arith.muli %arg0, %c1_i32 : i32
    %1 = arith.addi %0, %arg1 : i32
    %c0_i32 = arith.constant 0 : i32
    %c0_i32_0 = arith.constant 0 : i32
    return %1, %c0_i32 : i32, i32
  }
  func.func @transform_5(%arg0: i32, %arg1: i32) -> (i32, i32) {
    %c1_i32 = arith.constant 1 : i32
    %0 = arith.muli %arg0, %c1_i32 : i32
    %1 = arith.addi %0, %arg1 : i32
    %c0_i32 = arith.constant 0 : i32
    %c0_i32_0 = arith.constant 0 : i32
    return %1, %c0_i32 : i32, i32
  }
  func.func @transform_6(%arg0: i32, %arg1: i32) -> (i32, i32) {
    %c0_i32 = arith.constant 0 : i32
    %c0_i32_0 = arith.constant 0 : i32
    return %arg0, %c0_i32 : i32, i32
  }
}

module attributes {stable_mosaic.version = 11 : i64} {
  func.func @_vs_pregathered_kernel(%arg0: i32, %arg1: i32, %arg2: memref<1x1xf32, #tpu.memory_space<smem>>, %arg3: memref<16x128xf32, #tpu.memory_space<vmem>>, %arg4: memref<16x128xf32, #tpu.memory_space<vmem>>, %arg5: memref<16x128xf32, #tpu.memory_space<vmem>>, %arg6: memref<16x128xf32, #tpu.memory_space<vmem>>, %arg7: memref<16x128xf32, #tpu.memory_space<vmem>>) attributes {dimension_semantics = [#tpu.dimension_semantics<parallel>, #tpu.dimension_semantics<arbitrary>], iteration_bounds = array<i64: 1, 1>, scalar_prefetch = 0 : i64, scratch_operands = 0 : i64, tpu.core_type = #tpu.core_type<tc>, window_params = [{transform_indices = @transform_0, window_bounds = array<i64: 1, 1>}, {transform_indices = @transform_1, window_bounds = array<i64: 16, 128>}, {transform_indices = @transform_2, window_bounds = array<i64: 16, 128>}, {transform_indices = @transform_3, window_bounds = array<i64: 16, 128>}, {transform_indices = @transform_4, window_bounds = array<i64: 16, 128>}, {transform_indices = @transform_5, window_bounds = array<i64: 16, 128>}]} {
    %c0_i32 = arith.constant 0 : i32
    %0 = arith.cmpi eq, %arg1, %c0_i32 : i32
    %1 = arith.extui %0 : i1 to i32
    %c0_i32_0 = arith.constant 0 : i32
    %2 = arith.cmpi ne, %1, %c0_i32_0 : i32
    scf.if %2 {
      %cst_16 = arith.constant 0.000000e+00 : f32
      %27 = vector.broadcast %cst_16 : f32 to vector<16x128xf32>
      %c0_17 = arith.constant 0 : index
      %c0_18 = arith.constant 0 : index
      %28 = vector.load %arg7[%c0_17, %c0_18] : memref<16x128xf32, #tpu.memory_space<vmem>>, vector<16x128xf32>
      tpu.vector_store %arg7[%c0_17, %c0_18], %27 {strides = array<i32>} : memref<16x128xf32, #tpu.memory_space<vmem>>, vector<16x128xf32>,
    } else {
    }
    %c0 = arith.constant 0 : index
    %c0_1 = arith.constant 0 : index
    %3 = memref.load %arg2[%c0, %c0_1] : memref<1x1xf32, #tpu.memory_space<smem>>
    %c0_2 = arith.constant 0 : index
    %c0_3 = arith.constant 0 : index
    %4 = vector.load %arg7[%c0_2, %c0_3] : memref<16x128xf32, #tpu.memory_space<vmem>>, vector<16x128xf32>
    %c0_4 = arith.constant 0 : index
    %c0_5 = arith.constant 0 : index
    %5 = vector.load %arg3[%c0_4, %c0_5] : memref<16x128xf32, #tpu.memory_space<vmem>>, vector<16x128xf32>
    %c0_6 = arith.constant 0 : index
    %c0_7 = arith.constant 0 : index
    %6 = vector.load %arg4[%c0_6, %c0_7] : memref<16x128xf32, #tpu.memory_space<vmem>>, vector<16x128xf32>
    %c0_8 = arith.constant 0 : index
    %c0_9 = arith.constant 0 : index
    %7 = vector.load %arg5[%c0_8, %c0_9] : memref<16x128xf32, #tpu.memory_space<vmem>>, vector<16x128xf32>
    %c0_10 = arith.constant 0 : index
    %c0_11 = arith.constant 0 : index
    %8 = vector.load %arg6[%c0_10, %c0_11] : memref<16x128xf32, #tpu.memory_space<vmem>>, vector<16x128xf32>
    %9 = arith.subf %5, %6 : vector<16x128xf32>
    %10 = vector.broadcast %3 : f32 to vector<16x128xf32>
    %11 = arith.mulf %10, %9 : vector<16x128xf32>
    %12 = arith.addf %6, %11 : vector<16x128xf32>
    %cst = arith.constant -13.8155098 : f32
    %cst_12 = arith.constant 13.8155098 : f32
    %13 = vector.broadcast %cst : f32 to vector<16x128xf32>
    %14 = arith.maximumf %13, %12 : vector<16x128xf32>
    %15 = vector.broadcast %cst_12 : f32 to vector<16x128xf32>
    %16 = arith.minimumf %15, %14 : vector<16x128xf32>
    %17 = math.exp %16 : vector<16x128xf32>
    %cst_13 = arith.constant 1.000000e+00 : f32
    %18 = vector.broadcast %cst_13 : f32 to vector<16x128xf32>
    %19 = arith.addf %18, %17 : vector<16x128xf32>
    %20 = math.log %19 : vector<16x128xf32>
    %21 = arith.mulf %7, %16 : vector<16x128xf32>
    %22 = arith.addf %7, %8 : vector<16x128xf32>
    %23 = arith.mulf %22, %20 : vector<16x128xf32>
    %24 = arith.subf %21, %23 : vector<16x128xf32>
    %25 = arith.addf %4, %24 : vector<16x128xf32>
    %c0_14 = arith.constant 0 : index
    %c0_15 = arith.constant 0 : index
    %26 = vector.load %arg7[%c0_14, %c0_15] : memref<16x128xf32, #tpu.memory_space<vmem>>, vector<16x128xf32>
    tpu.vector_store %arg7[%c0_14, %c0_15], %25 {strides = array<i32>} : memref<16x128xf32, #tpu.memory_space<vmem>>, vector<16x128xf32>,
    return
  }
  func.func @transform_0(%arg0: i32, %arg1: i32) -> (i32, i32) {
    %c0_i32 = arith.constant 0 : i32
    %c0_i32_0 = arith.constant 0 : i32
    %c0_i32_1 = arith.constant 0 : i32
    return %c0_i32, %c0_i32_0 : i32, i32
  }
  func.func @transform_1(%arg0: i32, %arg1: i32) -> (i32, i32) {
    %c1_i32 = arith.constant 1 : i32
    %0 = arith.muli %arg0, %c1_i32 : i32
    %1 = arith.addi %0, %arg1 : i32
    %c0_i32 = arith.constant 0 : i32
    %c0_i32_0 = arith.constant 0 : i32
    return %1, %c0_i32 : i32, i32
  }
  func.func @transform_2(%arg0: i32, %arg1: i32) -> (i32, i32) {
    %c1_i32 = arith.constant 1 : i32
    %0 = arith.muli %arg0, %c1_i32 : i32
    %1 = arith.addi %0, %arg1 : i32
    %c0_i32 = arith.constant 0 : i32
    %c0_i32_0 = arith.constant 0 : i32
    return %1, %c0_i32 : i32, i32
  }
  func.func @transform_3(%arg0: i32, %arg1: i32) -> (i32, i32) {
    %c1_i32 = arith.constant 1 : i32
    %0 = arith.muli %arg0, %c1_i32 : i32
    %1 = arith.addi %0, %arg1 : i32
    %c0_i32 = arith.constant 0 : i32
    %c0_i32_0 = arith.constant 0 : i32
    return %1, %c0_i32 : i32, i32
  }
  func.func @transform_4(%arg0: i32, %arg1: i32) -> (i32, i32) {
    %c1_i32 = arith.constant 1 : i32
    %0 = arith.muli %arg0, %c1_i32 : i32
    %1 = arith.addi %0, %arg1 : i32
    %c0_i32 = arith.constant 0 : i32
    %c0_i32_0 = arith.constant 0 : i32
    return %1, %c0_i32 : i32, i32
  }
  func.func @transform_5(%arg0: i32, %arg1: i32) -> (i32, i32) {
    %c0_i32 = arith.constant 0 : i32
    %c0_i32_0 = arith.constant 0 : i32
    return %arg0, %c0_i32 : i32, i32
  }
}

</mosaic_0001>

<llo_original>
// kernel: tpu_custom_call.1
$region0: #{tpu_custom_call.1}
  #allocation0 [shape = 'u32[]', space=smem, size = 0x4, offset = 0x4, fixed_abs, tag = 'smem constant byte address 0x4 - core index']
  #allocation1 [shape = 'u32[72,128]{1,0:T(1,128)}', space=vmem, size = 0x9000, scoped, tag = 'internal scratch']
  #allocation2 [shape = 'f32[1,1]{1,0:T(1,128)S(6)}', space=smem, size = 0x200, scoped, tag = 'scoped memory for tpu_custom_call.1']
  %s0 = inlined_call_operand.<no memory space> [shape: f32[1,1], index: 0, kind: input, shape index: {}]
  %s1 = inlined_call_operand.vmem [shape: f32[1,128], index: 1, kind: input, shape index: {}]
  %s2 = inlined_call_operand.vmem [shape: f32[1,128], index: 2, kind: input, shape index: {}]
  %s3 = inlined_call_operand.hbm [shape: s32[16,128], index: 3, kind: input, shape index: {}]
  %s4 = inlined_call_operand.hbm [shape: bf16[16,128], index: 4, kind: input, shape index: {}]
  %s5 = inlined_call_operand.hbm [shape: bf16[16,128], index: 5, kind: input, shape index: {}]
  %s6 = inlined_call_operand.hbm [shape: f32[8,128], index: 6, kind: output, shape index: {}]
  %s7 = sld [smem:[#allocation0]]
  $region50: #{tpu_custom_call.1} parent=0
    _
  %s9 = ssub.s32 1, %s7
  %s10 = scalar_select 0, %s9, %s7
  %11 = sst [smem:[#allocation2]] %s0
  $region1: #{tpu_custom_call.1} parent=0
    #allocation3 [shape = 'u8[8192]{0}', space=vmem, size = 0x2000, scoped, tag = 'input window, operand 3, single buffered']
    #allocation4 [shape = 's32[1]{0}', space=sflag, size = 0x4, scoped, tag = 'scoped memory for tpu_custom_call.1']
    #allocation5 [shape = 's32[1]{0}', space=sflag, size = 0x4, scoped, tag = 'scoped memory for tpu_custom_call.1']
    #allocation6 [shape = 'u8[4096]{0}', space=vmem, size = 0x1000, scoped, tag = 'input window, operand 4, single buffered']
    #allocation7 [shape = 's32[1]{0}', space=sflag, size = 0x4, scoped, tag = 'scoped memory for tpu_custom_call.1']
    #allocation8 [shape = 'u8[4096]{0}', space=vmem, size = 0x1000, scoped, tag = 'input window, operand 5, single buffered']
    #allocation9 [shape = 'u8[4096]{0}', space=vmem, size = 0x1000, scoped, tag = 'output window, operand 0, single buffered']
    %12 = vsyncpa [#allocation4], 0
    %13 = vsyncpa [#allocation7], 0
    %14 = vsyncpa [#allocation5], 0
    // Predicated region
    $region2: #{tpu_custom_call.1} parent=1 // pred_check
      _
    $region3: #{tpu_custom_call.1} parent=1 // pred_check_branch
      %16 = sbr.rel (0) target = $region5
    $region4: #{tpu_custom_call.1} parent=1 // pred_region
      _
    $region5: #{tpu_custom_call.1} parent=1 // pred_fallthru
      _
    // Predicated region
    $region6: #{tpu_custom_call.1} parent=1 // pred_check
      _
    $region7: #{tpu_custom_call.1} parent=1 // pred_check_branch
      %18 = sbr.rel (0) target = $region9
    $region8: #{tpu_custom_call.1} parent=1 // pred_region
      _
    $region9: #{tpu_custom_call.1} parent=1 // pred_fallthru
      _
    // Predicated region
    $region10: #{tpu_custom_call.1} parent=1 // pred_check
      _
    $region11: #{tpu_custom_call.1} parent=1 // pred_check_branch
      %20 = sbr.rel (0) target = $region13
    $region12: #{tpu_custom_call.1} parent=1 // pred_region
      _
    $region13: #{tpu_custom_call.1} parent=1 // pred_fallthru
      _
    // Predicated region
    $region14: #{tpu_custom_call.1} parent=1 // pred_check
      _
    $region15: #{tpu_custom_call.1} parent=1 // pred_check_branch
      %22 = sbr.rel (0) target = $region17
    $region16: #{tpu_custom_call.1} parent=1 // pred_region
      %s23 = sadd.s32 0, 0
      %s24 = smul.u32 2, %s23
      %26 = vsyncadd [#allocation4], 0
      %s27 = smul.addr %s24, 8
      %s28 = scalar_lea.hbm %s3, %s27
      %s29 = sshll.u32 %s28, 4
      %s30 = int_to_ptr.hbm [resolvable:$true] %s29
      %s31 = sshll.u32 [#allocation3], 4
      %s32 = int_to_ptr.vmem [resolvable:$true] %s31
      %37 = dma.hbm_to_vmem [thread:$0]  %s30, 256, %s32, [#allocation4], 128, 128, 8
    $region17: #{tpu_custom_call.1} parent=1 // pred_fallthru
      _
    // Predicated region
    $region18: #{tpu_custom_call.1} parent=1 // pred_check
      _
    $region19: #{tpu_custom_call.1} parent=1 // pred_check_branch
      %39 = sbr.rel (0) target = $region21
    $region20: #{tpu_custom_call.1} parent=1 // pred_region
      %s40 = sadd.s32 0, 0
      %s41 = smul.u32 2, %s40
      %43 = vsyncadd [#allocation7], 0
      %s44 = smul.addr %s41, 4
      %s45 = scalar_lea.hbm %s4, %s44
      %s46 = sshll.u32 %s45, 4
      %s47 = int_to_ptr.hbm [resolvable:$true] %s46
      %s48 = sshll.u32 [#allocation6], 4
      %s49 = int_to_ptr.vmem [resolvable:$true] %s48
      %54 = dma.hbm_to_vmem [thread:$0]  %s47, 128, %s49, [#allocation7], 64, 64, 4
    $region21: #{tpu_custom_call.1} parent=1 // pred_fallthru
      _
    // Predicated region
    $region22: #{tpu_custom_call.1} parent=1 // pred_check
      _
    $region23: #{tpu_custom_call.1} parent=1 // pred_check_branch
      %56 = sbr.rel (0) target = $region25
    $region24: #{tpu_custom_call.1} parent=1 // pred_region
      %s57 = sadd.s32 0, 0
      %s58 = smul.u32 2, %s57
      %60 = vsyncadd [#allocation7], 0
      %s61 = smul.addr %s58, 4
      %s62 = scalar_lea.hbm %s5, %s61
      %s63 = sshll.u32 %s62, 4
      %s64 = int_to_ptr.hbm [resolvable:$true] %s63
      %s65 = sshll.u32 [#allocation8], 4
      %s66 = int_to_ptr.vmem [resolvable:$true] %s65
      %71 = dma.hbm_to_vmem [thread:$0]  %s64, 128, %s66, [#allocation7], 64, 64, 4
    $region25: #{tpu_custom_call.1} parent=1 // pred_fallthru
      _
    // Predicated region
    $region26: #{tpu_custom_call.1} parent=1 // pred_check
      _
    $region27: #{tpu_custom_call.1} parent=1 // pred_check_branch
      %73 = sbr.rel (0) target = $region29
    $region28: #{tpu_custom_call.1} parent=1 // pred_region
      %75 = dma.done [#allocation4], 256
    $region29: #{tpu_custom_call.1} parent=1 // pred_fallthru
      _
    // Predicated region
    $region30: #{tpu_custom_call.1} parent=1 // pred_check
      _
    $region31: #{tpu_custom_call.1} parent=1 // pred_check_branch
      %77 = sbr.rel (0) target = $region33
    $region32: #{tpu_custom_call.1} parent=1 // pred_region
      %79 = dma.done [#allocation7], 128
    $region33: #{tpu_custom_call.1} parent=1 // pred_fallthru
      _
    // Predicated region
    $region34: #{tpu_custom_call.1} parent=1 // pred_check
      _
    $region35: #{tpu_custom_call.1} parent=1 // pred_check_branch
      %81 = sbr.rel (0) target = $region37
    $region36: #{tpu_custom_call.1} parent=1 // pred_region
      %83 = dma.done [#allocation7], 128
    $region37: #{tpu_custom_call.1} parent=1 // pred_fallthru
      _
    %s84 = sadd.s32 0, 0
    %s85 = smul.u32 2, %s84
    %s86 = sadd.s32 0, 0
    %s87 = smul.u32 2, %s86
    %s88 = sadd.s32 0, 0
    %s89 = smul.u32 2, %s88
    %p90 = scmp.eq.s32.totalorder 0, 0
    // Predicated region
    $region38: #{tpu_custom_call.1} parent=1 // pred_check
      %p91 = pneg %p90
    $region39: #{tpu_custom_call.1} parent=1 // pred_check_branch
      %93 = sbr.rel (%p91) target = $region41
    $region40: #{tpu_custom_call.1} parent=1 // pred_region
      %94 = vst [vmem:[#allocation9] sm:$0xff] 0.0
    $region41: #{tpu_custom_call.1} parent=1 // pred_fallthru
      _
    %s95 = sld [smem:[#allocation2]]
    %v96 = vld [vmem:[#allocation3] sm:$0xff]
    %v97 = vld [vmem:[#allocation3 + $0x8] sm:$0xff]
    %v98 = vand.u32 %v96, 65535
    %v99 = vand.u32 %v97, 65535
    %v100 = vshra.s32 %v96, 16
    %v101 = vshra.s32 %v97, 16
    %v102 = vld [vmem:[%s1] sm:$0x1]
    %v104 = vperm.slane %v102, 0
    %vm106 = vcmp.lt.s32.totalorder %v98, 0
    %vm107 = vcmp.lt.s32.totalorder %v99, 0
    %v108 = vadd.s32 %v98, 128
    %v109 = vadd.s32 %v99, 128
    %v110 = vsel %vm106, %v108, %v98
    %v111 = vsel %vm107, %v109, %v99
    %112 = vset.pattern.permute.xlu0 %v110
    %113 = vperm.xlu0 %112, %v104
    %v114 = vpop.permute.xlu0 %113
    %115 = vset.pattern.permute.xlu0 %v111
    %116 = vperm.xlu0 %115, %v104
    %v117 = vpop.permute.xlu0 %116
    %v118 = vld [vmem:[%s2] sm:$0x1]
    %v120 = vperm.slane %v118, 0
    %vm122 = vcmp.lt.s32.totalorder %v100, 0
    %vm123 = vcmp.lt.s32.totalorder %v101, 0
    %v124 = vadd.s32 %v100, 128
    %v125 = vadd.s32 %v101, 128
    %v126 = vsel %vm122, %v124, %v100
    %v127 = vsel %vm123, %v125, %v101
    %128 = vset.pattern.permute.xlu0 %v126
    %129 = vperm.xlu0 %128, %v120
    %v130 = vpop.permute.xlu0 %129
    %131 = vset.pattern.permute.xlu0 %v127
    %132 = vperm.xlu0 %131, %v120
    %v133 = vpop.permute.xlu0 %132
    %v134 = vld [vmem:[#allocation6] sm:$0xf]
    %v135 = vld [vmem:[#allocation6 + $0x4] sm:$0xf]
    %v136 = vunpack.c.l.bf16 %v134
    %v137 = vunpack.c.l.bf16 %v135
    %v138 = vld [vmem:[#allocation8] sm:$0xf]
    %v139 = vld [vmem:[#allocation8 + $0x4] sm:$0xf]
    %v140 = vunpack.c.l.bf16 %v138
    %v141 = vunpack.c.l.bf16 %v139
    %v142 = vsub.f32 %v114, %v130
    %v143 = vsub.f32 %v117, %v133
    %v144 = vstv %s95
    %v145 = vmul.f32 %v144, %v142
    %v146 = vmul.f32 %v144, %v143
    %v147 = vadd.f32 %v130, %v145
    %v148 = vadd.f32 %v133, %v146
    %v149 = vmax.f32 %v147, -13.81551
    %v150 = vmax.f32 %v148, -13.81551
    %v151 = vmin.f32 %v149, 13.81551
    %v152 = vmin.f32 %v150, 13.81551
    %v153 = vmul.f32 %v151, 1.442695
    %v154 = vpow.pop %v153
    %v155 = vmul.f32 %v152, 1.442695
    %v156 = vpow.pop %v155
    %v157 = vadd.f32 %v154, 1.0
    %v158 = vadd.f32 %v156, 1.0
    %v159 = vlog2.pop %v157
    %v160 = vmul.f32 %v159, 0.6931472
    %v161 = vlog2.pop %v158
    %v162 = vmul.f32 %v161, 0.6931472
    %v163 = vmul.f32 %v136, %v151
    %v164 = vmul.f32 %v137, %v152
    %v165 = vadd.f32 %v136, %v140
    %v166 = vadd.f32 %v137, %v141
    %v167 = vmul.f32 %v165, %v160
    %v168 = vmul.f32 %v166, %v162
    %v169 = vsub.f32 %v163, %v167
    %v170 = vsub.f32 %v164, %v168
    %v171 = vld [vmem:[#allocation9] sm:$0xff]
    %v172 = vadd.f32 %v169, %v170
    %v173 = vadd.f32 %v171, %v172
    %174 = vst [vmem:[#allocation9] sm:$0xff] %v173
    // Predicated region
    $region42: #{tpu_custom_call.1} parent=1 // pred_check
      _
    $region43: #{tpu_custom_call.1} parent=1 // pred_check_branch
      %176 = sbr.rel (0) target = $region45
    $region44: #{tpu_custom_call.1} parent=1 // pred_region
      %178 = vsyncadd [#allocation5], 0
      %s180 = sshll.u32 [#allocation9], 4
      %s181 = int_to_ptr.vmem [resolvable:$true] %s180
      %s182 = sshll.u32 %s6, 4
      %s183 = int_to_ptr.hbm [resolvable:$true] %s182
      %185 = dma.vmem_to_hbm [thread:$0]  %s181, 128, %s183, [#allocation5]
    $region45: #{tpu_custom_call.1} parent=1 // pred_fallthru
      _
    // Predicated region
    $region46: #{tpu_custom_call.1} parent=1 // pred_check
      _
    $region47: #{tpu_custom_call.1} parent=1 // pred_check_branch
      %187 = sbr.rel (0) target = $region49
    $region48: #{tpu_custom_call.1} parent=1 // pred_region
      %189 = dma.done [#allocation5], 128
    $region49: #{tpu_custom_call.1} parent=1 // pred_fallthru
      _
    %190 = vsyncpa [#allocation4], 1
    %191 = vsyncpa [#allocation7], 1
    %192 = vsyncpa [#allocation5], 1

// kernel: tpu_custom_call.1
$region0: #{tpu_custom_call.1}
  #allocation0 [shape = 'u32[]', space=smem, size = 0x4, offset = 0x4, fixed_abs, tag = 'smem constant byte address 0x4 - core index']
  #allocation1 [shape = 'u32[72,128]{1,0:T(1,128)}', space=vmem, size = 0x9000, scoped, tag = 'internal scratch']
  #allocation2 [shape = 'f32[1,1]{1,0:T(1,128)S(6)}', space=smem, size = 0x200, scoped, tag = 'scoped memory for tpu_custom_call.1']
  %s0 = inlined_call_operand.<no memory space> [shape: f32[1,1], index: 0, kind: input, shape index: {}]
  %s1 = inlined_call_operand.hbm [shape: f32[16,128], index: 1, kind: input, shape index: {}]
  %s2 = inlined_call_operand.hbm [shape: f32[16,128], index: 2, kind: input, shape index: {}]
  %s3 = inlined_call_operand.hbm [shape: f32[16,128], index: 3, kind: input, shape index: {}]
  %s4 = inlined_call_operand.hbm [shape: f32[16,128], index: 4, kind: input, shape index: {}]
  %s5 = inlined_call_operand.hbm [shape: f32[16,128], index: 5, kind: output, shape index: {}]
  %s6 = sld [smem:[#allocation0]]
  $region50: #{tpu_custom_call.1} parent=0
    _
  %s8 = ssub.s32 1, %s6
  %s9 = scalar_select 0, %s8, %s6
  %10 = sst [smem:[#allocation2]] %s0
  $region1: #{tpu_custom_call.1} parent=0
    #allocation3 [shape = 'u8[8192]{0}', space=vmem, size = 0x2000, scoped, tag = 'input window, operand 1, single buffered']
    #allocation4 [shape = 's32[1]{0}', space=sflag, size = 0x4, scoped, tag = 'scoped memory for tpu_custom_call.1']
    #allocation5 [shape = 's32[1]{0}', space=sflag, size = 0x4, scoped, tag = 'scoped memory for tpu_custom_call.1']
    #allocation6 [shape = 'u8[8192]{0}', space=vmem, size = 0x2000, scoped, tag = 'input window, operand 2, single buffered']
    #allocation7 [shape = 's32[1]{0}', space=sflag, size = 0x4, scoped, tag = 'scoped memory for tpu_custom_call.1']
    #allocation8 [shape = 'u8[8192]{0}', space=vmem, size = 0x2000, scoped, tag = 'input window, operand 3, single buffered']
    #allocation9 [shape = 'u8[8192]{0}', space=vmem, size = 0x2000, scoped, tag = 'input window, operand 4, single buffered']
    #allocation10 [shape = 's32[1]{0}', space=sflag, size = 0x4, scoped, tag = 'scoped memory for tpu_custom_call.1']
    #allocation11 [shape = 'u8[8192]{0}', space=vmem, size = 0x2000, scoped, tag = 'output window, operand 0, single buffered']
    %11 = vsyncpa [#allocation4], 0
    %12 = vsyncpa [#allocation7], 0
    %13 = vsyncpa [#allocation10], 0
    %14 = vsyncpa [#allocation5], 0
    // Predicated region
    $region2: #{tpu_custom_call.1} parent=1 // pred_check
      _
    $region3: #{tpu_custom_call.1} parent=1 // pred_check_branch
      %16 = sbr.rel (0) target = $region5
    $region4: #{tpu_custom_call.1} parent=1 // pred_region
      _
    $region5: #{tpu_custom_call.1} parent=1 // pred_fallthru
      _
    // Predicated region
    $region6: #{tpu_custom_call.1} parent=1 // pred_check
      _
    $region7: #{tpu_custom_call.1} parent=1 // pred_check_branch
      %18 = sbr.rel (0) target = $region9
    $region8: #{tpu_custom_call.1} parent=1 // pred_region
      %s19 = sadd.s32 0, 0
      %s20 = smul.u32 2, %s19
      %22 = vsyncadd [#allocation4], 0
      %s23 = smul.addr %s20, 8
      %s24 = scalar_lea.hbm %s1, %s23
      %s25 = sshll.u32 %s24, 4
      %s26 = int_to_ptr.hbm [resolvable:$true] %s25
      %s27 = sshll.u32 [#allocation3], 4
      %s28 = int_to_ptr.vmem [resolvable:$true] %s27
      %33 = dma.hbm_to_vmem [thread:$0]  %s26, 256, %s28, [#allocation4], 128, 128, 8
    $region9: #{tpu_custom_call.1} parent=1 // pred_fallthru
      _
    // Predicated region
    $region10: #{tpu_custom_call.1} parent=1 // pred_check
      _
    $region11: #{tpu_custom_call.1} parent=1 // pred_check_branch
      %35 = sbr.rel (0) target = $region13
    $region12: #{tpu_custom_call.1} parent=1 // pred_region
      %s36 = sadd.s32 0, 0
      %s37 = smul.u32 2, %s36
      %39 = vsyncadd [#allocation7], 0
      %s40 = smul.addr %s37, 8
      %s41 = scalar_lea.hbm %s2, %s40
      %s42 = sshll.u32 %s41, 4
      %s43 = int_to_ptr.hbm [resolvable:$true] %s42
      %s44 = sshll.u32 [#allocation6], 4
      %s45 = int_to_ptr.vmem [resolvable:$true] %s44
      %50 = dma.hbm_to_vmem [thread:$0]  %s43, 256, %s45, [#allocation7], 128, 128, 8
    $region13: #{tpu_custom_call.1} parent=1 // pred_fallthru
      _
    // Predicated region
    $region14: #{tpu_custom_call.1} parent=1 // pred_check
      _
    $region15: #{tpu_custom_call.1} parent=1 // pred_check_branch
      %52 = sbr.rel (0) target = $region17
    $region16: #{tpu_custom_call.1} parent=1 // pred_region
      %s53 = sadd.s32 0, 0
      %s54 = smul.u32 2, %s53
      %56 = vsyncadd [#allocation7], 0
      %s57 = smul.addr %s54, 8
      %s58 = scalar_lea.hbm %s3, %s57
      %s59 = sshll.u32 %s58, 4
      %s60 = int_to_ptr.hbm [resolvable:$true] %s59
      %s61 = sshll.u32 [#allocation8], 4
      %s62 = int_to_ptr.vmem [resolvable:$true] %s61
      %67 = dma.hbm_to_vmem [thread:$0]  %s60, 256, %s62, [#allocation7], 128, 128, 8
    $region17: #{tpu_custom_call.1} parent=1 // pred_fallthru
      _
    // Predicated region
    $region18: #{tpu_custom_call.1} parent=1 // pred_check
      _
    $region19: #{tpu_custom_call.1} parent=1 // pred_check_branch
      %69 = sbr.rel (0) target = $region21
    $region20: #{tpu_custom_call.1} parent=1 // pred_region
      %s70 = sadd.s32 0, 0
      %s71 = smul.u32 2, %s70
      %73 = vsyncadd [#allocation10], 0
      %s74 = smul.addr %s71, 8
      %s75 = scalar_lea.hbm %s4, %s74
      %s76 = sshll.u32 %s75, 4
      %s77 = int_to_ptr.hbm [resolvable:$true] %s76
      %s78 = sshll.u32 [#allocation9], 4
      %s79 = int_to_ptr.vmem [resolvable:$true] %s78
      %84 = dma.hbm_to_vmem [thread:$0]  %s77, 256, %s79, [#allocation10], 128, 128, 8
    $region21: #{tpu_custom_call.1} parent=1 // pred_fallthru
      _
    // Predicated region
    $region22: #{tpu_custom_call.1} parent=1 // pred_check
      _
    $region23: #{tpu_custom_call.1} parent=1 // pred_check_branch
      %86 = sbr.rel (0) target = $region25
    $region24: #{tpu_custom_call.1} parent=1 // pred_region
      %88 = dma.done [#allocation4], 256
    $region25: #{tpu_custom_call.1} parent=1 // pred_fallthru
      _
    // Predicated region
    $region26: #{tpu_custom_call.1} parent=1 // pred_check
      _
    $region27: #{tpu_custom_call.1} parent=1 // pred_check_branch
      %90 = sbr.rel (0) target = $region29
    $region28: #{tpu_custom_call.1} parent=1 // pred_region
      %92 = dma.done [#allocation7], 256
    $region29: #{tpu_custom_call.1} parent=1 // pred_fallthru
      _
    // Predicated region
    $region30: #{tpu_custom_call.1} parent=1 // pred_check
      _
    $region31: #{tpu_custom_call.1} parent=1 // pred_check_branch
      %94 = sbr.rel (0) target = $region33
    $region32: #{tpu_custom_call.1} parent=1 // pred_region
      %96 = dma.done [#allocation7], 256
    $region33: #{tpu_custom_call.1} parent=1 // pred_fallthru
      _
    // Predicated region
    $region34: #{tpu_custom_call.1} parent=1 // pred_check
      _
    $region35: #{tpu_custom_call.1} parent=1 // pred_check_branch
      %98 = sbr.rel (0) target = $region37
    $region36: #{tpu_custom_call.1} parent=1 // pred_region
      %100 = dma.done [#allocation10], 256
    $region37: #{tpu_custom_call.1} parent=1 // pred_fallthru
      _
    %s101 = sadd.s32 0, 0
    %s102 = smul.u32 2, %s101
    %s103 = sadd.s32 0, 0
    %s104 = smul.u32 2, %s103
    %s105 = sadd.s32 0, 0
    %s106 = smul.u32 2, %s105
    %s107 = sadd.s32 0, 0
    %s108 = smul.u32 2, %s107
    %p109 = scmp.eq.s32.totalorder 0, 0
    // Predicated region
    $region38: #{tpu_custom_call.1} parent=1 // pred_check
      %p110 = pneg %p109
    $region39: #{tpu_custom_call.1} parent=1 // pred_check_branch
      %112 = sbr.rel (%p110) target = $region41
    $region40: #{tpu_custom_call.1} parent=1 // pred_region
      %113 = vst [vmem:[#allocation11] sm:$0xff] 0.0
      %114 = vst [vmem:[#allocation11 + $0x8] sm:$0xff] 0.0
    $region41: #{tpu_custom_call.1} parent=1 // pred_fallthru
      _
    %s115 = sld [smem:[#allocation2]]
    %v116 = vld [vmem:[#allocation11] sm:$0xff]
    %v117 = vld [vmem:[#allocation11 + $0x8] sm:$0xff]
    %v118 = vld [vmem:[#allocation3] sm:$0xff]
    %v119 = vld [vmem:[#allocation3 + $0x8] sm:$0xff]
    %v120 = vld [vmem:[#allocation6] sm:$0xff]
    %v121 = vld [vmem:[#allocation6 + $0x8] sm:$0xff]
    %v122 = vld [vmem:[#allocation8] sm:$0xff]
    %v123 = vld [vmem:[#allocation8 + $0x8] sm:$0xff]
    %v124 = vld [vmem:[#allocation9] sm:$0xff]
    %v125 = vld [vmem:[#allocation9 + $0x8] sm:$0xff]
    %v126 = vsub.f32 %v118, %v120
    %v127 = vsub.f32 %v119, %v121
    %v128 = vstv %s115
    %v129 = vmul.f32 %v128, %v126
    %v130 = vmul.f32 %v128, %v127
    %v131 = vadd.f32 %v120, %v129
    %v132 = vadd.f32 %v121, %v130
    %v133 = vmax.f32 %v131, -13.81551
    %v134 = vmax.f32 %v132, -13.81551
    %v135 = vmin.f32 %v133, 13.81551
    %v136 = vmin.f32 %v134, 13.81551
    %v137 = vmul.f32 %v135, 1.442695
    %v138 = vpow.pop %v137
    %v139 = vmul.f32 %v136, 1.442695
    %v140 = vpow.pop %v139
    %v141 = vadd.f32 %v138, 1.0
    %v142 = vadd.f32 %v140, 1.0
    %v143 = vlog2.pop %v141
    %v144 = vmul.f32 %v143, 0.6931472
    %v145 = vlog2.pop %v142
    %v146 = vmul.f32 %v145, 0.6931472
    %v147 = vmul.f32 %v122, %v135
    %v148 = vmul.f32 %v123, %v136
    %v149 = vadd.f32 %v122, %v124
    %v150 = vadd.f32 %v123, %v125
    %v151 = vmul.f32 %v149, %v144
    %v152 = vmul.f32 %v150, %v146
    %v153 = vsub.f32 %v147, %v151
    %v154 = vsub.f32 %v148, %v152
    %v155 = vadd.f32 %v116, %v153
    %v156 = vadd.f32 %v117, %v154
    %157 = vst [vmem:[#allocation11] sm:$0xff] %v155
    %158 = vst [vmem:[#allocation11 + $0x8] sm:$0xff] %v156
    // Predicated region
    $region42: #{tpu_custom_call.1} parent=1 // pred_check
      _
    $region43: #{tpu_custom_call.1} parent=1 // pred_check_branch
      %160 = sbr.rel (0) target = $region45
    $region44: #{tpu_custom_call.1} parent=1 // pred_region
      %162 = vsyncadd [#allocation5], 0
      %s163 = sshll.u32 [#allocation11], 4
      %s164 = int_to_ptr.vmem [resolvable:$true] %s163
      %s165 = sshll.u32 %s5, 4
      %s166 = int_to_ptr.hbm [resolvable:$true] %s165
      %171 = dma.vmem_to_hbm [thread:$0]  %s164, 256, %s166, [#allocation5], 128, 128, 8
    $region45: #{tpu_custom_call.1} parent=1 // pred_fallthru
      _
    // Predicated region
    $region46: #{tpu_custom_call.1} parent=1 // pred_check
      _
    $region47: #{tpu_custom_call.1} parent=1 // pred_check_branch
      %173 = sbr.rel (0) target = $region49
    $region48: #{tpu_custom_call.1} parent=1 // pred_region
      %175 = dma.done [#allocation5], 256
    $region49: #{tpu_custom_call.1} parent=1 // pred_fallthru
      _
    %176 = vsyncpa [#allocation4], 1
    %177 = vsyncpa [#allocation7], 1
    %178 = vsyncpa [#allocation10], 1
    %179 = vsyncpa [#allocation5], 1

</llo_original>
